<compile_context>
chip_gen: v6e
topology: v6e:2x2x1
jax: 0.10.0
libtpu: 0.0.40
codegen_flags: <defaults>
</compile_context>

<pallas_src>
import functools

import jax
import jax.numpy as jnp
from jax import lax
from jax.experimental import pallas as pl
from jax.experimental.pallas import tpu as pltpu

_LANE = 128
_ACC_BUDGET_BYTES = 128 * 1024  # keep the f32 accumulator within ~half the vreg file


def _vmem_limit_bytes():
    # Derive the scoped-VMEM budget from the physical capacity of the attached
    # generation (v5e/v6e: 128 MiB -> ~96 MiB; v7x: 64 MiB -> ~48 MiB).
    try:
        cap = int(pltpu.get_tpu_info().vmem_capacity_bytes)
    except Exception:
        cap = 128 * 1024 * 1024
    return max(32 * 1024 * 1024, min((cap * 3) // 4, 100 * 1024 * 1024))


def _pick_tiling(l_out, l_in, c_out, pad, max_off, max_tile_l=None):
    """Pick (tile_l, num_tiles).

    Tiled mode (num_tiles > 1) requires every *interior* tile's direct tap slices
    [t*tile_l - pad, t*tile_l + tile_l + max_off) to be in-bounds of the unpadded
    input, so boundary handling stays confined to the (static) first/last tiles.
    """
    cands = [c for c in (2048, 1024, 512, 256, 128)
             if c * c_out * 4 <= _ACC_BUDGET_BYTES]
    if not cands:
        # TODO(synk): for c_out > 256 a VMEM f32 accumulator scratch would avoid
        # spill pressure; 128-wide tiles are accepted as-is for now.
        cands = [128]
    if max_tile_l is not None:
        cands = [c for c in cands if c <= max_tile_l] or [min(128, max_tile_l)]
    for c in cands:  # descending -> first valid is the largest valid
        if c >= l_out or c <= pad:
            continue
        num = -(-l_out // c)
        if (num - 1) * c + max_off <= l_in:
            return c, num
    # Small (or pathological) sequence: one full-length tile, fully static slicing.
    return l_out, 1


def _conv1d_kernel(x_ref, w_ref, o_ref, *, k_size, dilation, pad, l_in,
                   tile_l, num_tiles, fuse_taps):
    # x_ref: (1, C_in, L_in)        full-length input for this batch element (NCL)
    # w_ref: (C_out, K*C_in)        taps pre-fused along the contraction dim
    # o_ref: (1, C_out, tile_l)     lane-dense output tile
    c_in = x_ref.shape[1]
    offs = [k * dilation - pad for k in range(k_size)]
    w = w_ref[...]  # tiny; loaded once per tile

    def compute(tap_fn):
        taps = [tap_fn(off) for off in offs]
        if fuse_taps and k_size > 1:
            slab = jnp.concatenate(taps, axis=0)          # (K*C_in, tile_l)
            y = jnp.dot(w, slab, preferred_element_type=jnp.float32)
        else:
            y = jnp.zeros((w.shape[0], tile_l), jnp.float32)
            for k in range(k_size):
                wk = w[:, k * c_in:(k + 1) * c_in]          # (C_out, C_in), static
                y = y + jnp.dot(wk, taps[k], preferred_element_type=jnp.float32)
        o_ref[0] = y.astype(o_ref.dtype)

    def static_tap(base):
        # Boundary tiles: base is a Python int, so slice starts/widths are static.
        # Assemble [left zeros | valid slice | right zeros] -> exact zero-pad conv.
        def tap(off):
            g0 = base + off
            lo = min(max(g0, 0), l_in)
            hi = min(max(g0 + tile_l, 0), l_in)
            width = max(hi - lo, 0)
            nleft = min(max(-g0, 0), tile_l)
            nright = tile_l - nleft - width
            parts = []
            if nleft > 0:
                parts.append(jnp.zeros((c_in, nleft), x_ref.dtype))
            if width > 0:
                parts.append(x_ref[0, :, pl.ds(lo, width)])
            if nright > 0:
                parts.append(jnp.zeros((c_in, nright), x_ref.dtype))
            return parts[0] if len(parts) == 1 else jnp.concatenate(parts, axis=1)
        return tap

    if num_tiles == 1:
        compute(static_tap(0))
        return

    t = pl.program_id(1)
    base = t * tile_l
    if tile_l % _LANE == 0:
        base = pl.multiple_of(base, _LANE)

    @pl.when(jnp.logical_and(t > 0, t < num_tiles - 1))
    def _interior():
        # Interior tiles: all tap reads are in-bounds by construction (see picker);
        # direct pl.ds slices, no zero assembly, no scratch, no copies.
        compute(lambda off: x_ref[0, :, pl.ds(base + off, tile_l)])

    @pl.when(t == 0)
    def _first():
        compute(static_tap(0))

    @pl.when(t == num_tiles - 1)
    def _last():
        compute(static_tap((num_tiles - 1) * tile_l))


def short_basic_conv_block(x_ncl, weight, *, stride=1, dilation=1, max_tile_l=None):
    """x_ncl: (N, C_in, L), weight: (C_out, C_in, K) (PyTorch layout).

    Returns (N, C_out, L_out), matching nn.Conv1d(..., bias=False) with
    padding = ((K-1)//2) * dilation.
    """
    n, c_in, l_in = x_ncl.shape
    c_out, c_in_w, k_size = weight.shape
    assert c_in == c_in_w
    pad = ((k_size - 1) // 2) * dilation
    l_out = (l_in + 2 * pad - dilation * (k_size - 1) - 1) // stride + 1

    if stride != 1:
        # TODO(synk): the module only ever uses stride=1; keep stride>1 on the XLA
        # conv path rather than relying on strided-lane Pallas loads.
        return lax.conv_general_dilated(
            x_ncl, weight, (stride,), [(pad, pad)], rhs_dilation=(dilation,),
            dimension_numbers=("NCH", "OIH", "NCH"))

    max_off = (k_size - 1) * dilation - pad
    tile_l, num_tiles = _pick_tiling(l_out, l_in, c_out, pad, max_off, max_tile_l)

    # Tiny weight re-layout: (C_out, C_in, K) -> (C_out, K*C_in). Negligible cost.
    w_fused = jnp.transpose(weight, (0, 2, 1)).reshape(c_out, k_size * c_in)
    w_fused = w_fused.astype(x_ncl.dtype)

    kernel = functools.partial(
        _conv1d_kernel,
        k_size=k_size, dilation=dilation, pad=pad, l_in=l_in,
        tile_l=tile_l, num_tiles=num_tiles,
        fuse_taps=(k_size > 1 and c_in % 8 == 0),
    )

    return pl.pallas_call(
        kernel,
        out_shape=jax.ShapeDtypeStruct((n, c_out, l_out), x_ncl.dtype),
        grid_spec=pltpu.PrefetchScalarGridSpec(
            num_scalar_prefetch=0,
            grid=(n, num_tiles),
            in_specs=[
                # Full-length input per batch element; constant block index along
                # the L-tile axis => fetched once per batch element (per core).
                # TODO(synk): for very long L x large C_in on v7x, a manual halo
                # DMA from an ANY-space ref would bound VMEM to O(C_in*tile_l).
                pl.BlockSpec((1, c_in, l_in), lambda b, t: (b, 0, 0)),
                # Fused weights: tiny, fetched once.
                pl.BlockSpec((c_out, k_size * c_in), lambda b, t: (0, 0)),
            ],
            # Lane-dense output tile: L on lanes, C_out on sublanes. Ragged last
            # block is clipped by Pallas on store.
            out_specs=pl.BlockSpec((1, c_out, tile_l), lambda b, t: (b, 0, t)),
        ),
        compiler_params=pltpu.CompilerParams(
            # No cross-tile state => both axes independent; lets v7x's second
            # TensorCore pick up L-tiles even at batch=1.
            dimension_semantics=("parallel", "parallel"),
            vmem_limit_bytes=_vmem_limit_bytes(),
        ),
    )(x_ncl, w_fused)


def _reference_conv1d(x_ncl, weight, *, stride=1, dilation=1):
    padding = ((weight.shape[-1] - 1) // 2) * dilation
    return lax.conv_general_dilated(
        x_ncl, weight,
        window_strides=(stride,),
        padding=[(padding, padding)],
        rhs_dilation=(dilation,),
        dimension_numbers=("NCH", "OIH", "NCH"),
    )


if __name__ == "__main__":
    key = jax.random.PRNGKey(0)

    def check(key, n, c_in, c_out, l, k_size, dil, max_tile_l=None):
        kx, kw = jax.random.split(key)
        x = jax.random.normal(kx, (n, c_in, l), dtype=jnp.float32)
        bound = 1.0 / (c_in * k_size) ** 0.5
        w = jax.random.uniform(kw, (c_out, c_in, k_size), jnp.float32, -bound, bound)
        y = jax.block_until_ready(
            short_basic_conv_block(x, w, dilation=dil, max_tile_l=max_tile_l))
        y_ref = _reference_conv1d(x, w, dilation=dil)
        assert y.shape == y_ref.shape, (y.shape, y_ref.shape)
        assert jnp.allclose(y, y_ref, atol=1e-4, rtol=1e-4), (
            f"mismatch for n={n} c_in={c_in} c_out={c_out} L={l} "
            f"kSize={k_size} dilation={dil}")

    # Small cases matching the module's conv usage (kSize in {1,3,5}, d in {1,2,4,8})
    # on tiny shapes: batch=2, nIn=4, nOut=8, L=16 -> single-tile path.
    cases = [
        (2, 4, 8, 16, 3, 1, None),
        (2, 4, 8, 16, 3, 2, None),
        (2, 4, 8, 16, 1, 1, None),
        (2, 4, 8, 16, 5, 1, None),
        # Multi-tile path (first / interior / last branches, ragged last tile,
        # fused-tap contraction since C_in % 8 == 0): L=300 with tile_l capped at 128.
        (1, 8, 8, 300, 3, 4, 128),
        # Exactly-divisible multi-tile path with a d=8 halo.
        (1, 8, 8, 256, 3, 8, 128),
    ]
    for case in cases:
        key, sub = jax.random.split(key)
        check(sub, *case)

    print("KERNEL_OK")
</pallas_src>

<mosaic_0001>
module attributes {stable_mosaic.version = 11 : i64} {
  func.func @_conv1d_kernel(%arg0: i32, %arg1: i32, %arg2: memref<1x4x16xf32, #tpu.memory_space<vmem>>, %arg3: memref<8x12xf32, #tpu.memory_space<vmem>>, %arg4: memref<1x8x16xf32, #tpu.memory_space<vmem>>) attributes {dimension_semantics = [#tpu.dimension_semantics<parallel>, #tpu.dimension_semantics<parallel>], iteration_bounds = array<i64: 2, 1>, scalar_prefetch = 0 : i64, scratch_operands = 0 : i64, tpu.core_type = #tpu.core_type<tc>, window_params = [{transform_indices = @transform_0, window_bounds = array<i64: 1, 4, 16>}, {pipeline_mode = #tpu.pipeline_mode<synchronous>, transform_indices = @transform_1, window_bounds = array<i64: 8, 12>}, {transform_indices = @transform_2, window_bounds = array<i64: 1, 8, 16>}]} {
    %c0 = arith.constant 0 : index
    %c0_0 = arith.constant 0 : index
    %0 = vector.load %arg3[%c0, %c0_0] : memref<8x12xf32, #tpu.memory_space<vmem>>, vector<8x12xf32>
    %cst = arith.constant 0.000000e+00 : f32
    %1 = vector.broadcast %cst : f32 to vector<4x1xf32>
    %c0_1 = arith.constant 0 : index
    %c0_2 = arith.constant 0 : index
    %c0_3 = arith.constant 0 : index
    %2 = vector.load %arg2[%c0_1, %c0_2, %c0_3] : memref<1x4x16xf32, #tpu.memory_space<vmem>>, vector<1x4x15xf32>
    %3 = vector.shape_cast %2 : vector<1x4x15xf32> to vector<4x15xf32>
    %4 = tpu.concatenate %1, %3 in 1 : vector<4x1xf32>, vector<4x15xf32> -> vector<4x16xf32>
    %c0_4 = arith.constant 0 : index
    %c0_5 = arith.constant 0 : index
    %c0_6 = arith.constant 0 : index
    %5 = vector.load %arg2[%c0_4, %c0_5, %c0_6] : memref<1x4x16xf32, #tpu.memory_space<vmem>>, vector<1x4x16xf32>
    %6 = vector.shape_cast %5 : vector<1x4x16xf32> to vector<4x16xf32>
    %c0_7 = arith.constant 0 : index
    %c0_8 = arith.constant 0 : index
    %c1 = arith.constant 1 : index
    %7 = vector.load %arg2[%c0_7, %c0_8, %c1] : memref<1x4x16xf32, #tpu.memory_space<vmem>>, vector<1x4x15xf32>
    %8 = vector.shape_cast %7 : vector<1x4x15xf32> to vector<4x15xf32>
    %cst_9 = arith.constant 0.000000e+00 : f32
    %9 = vector.broadcast %cst_9 : f32 to vector<4x1xf32>
    %10 = tpu.concatenate %8, %9 in 1 : vector<4x15xf32>, vector<4x1xf32> -> vector<4x16xf32>
    %cst_10 = arith.constant 0.000000e+00 : f32
    %11 = vector.broadcast %cst_10 : f32 to vector<8x16xf32>
    %12 = vector.extract_strided_slice %0 {offsets = [0, 0], sizes = [8, 4], strides = [1, 1]} : vector<8x12xf32> to vector<8x4xf32>
    %cst_11 = arith.constant dense<0.000000e+00> : vector<8x16xf32>
    %13 = tpu.matmul %12, %4, %cst_11 {dimension_numbers = #tpu.dot_dimension_numbers<[1], [0], [0], [1], [0, 0, 1, 1], [], []>} : vector<8x4xf32>, vector<4x16xf32>, vector<8x16xf32> -> vector<8x16xf32>
    %14 = arith.addf %11, %13 : vector<8x16xf32>
    %15 = vector.extract_strided_slice %0 {offsets = [0, 4], sizes = [8, 4], strides = [1, 1]} : vector<8x12xf32> to vector<8x4xf32>
    %cst_12 = arith.constant dense<0.000000e+00> : vector<8x16xf32>
    %16 = tpu.matmul %15, %6, %cst_12 {dimension_numbers = #tpu.dot_dimension_numbers<[1], [0], [0], [1], [0, 0, 1, 1], [], []>} : vector<8x4xf32>, vector<4x16xf32>, vector<8x16xf32> -> vector<8x16xf32>
    %17 = arith.addf %14, %16 : vector<8x16xf32>
    %18 = vector.extract_strided_slice %0 {offsets = [0, 8], sizes = [8, 4], strides = [1, 1]} : vector<8x12xf32> to vector<8x4xf32>
    %cst_13 = arith.constant dense<0.000000e+00> : vector<8x16xf32>
    %19 = tpu.matmul %18, %10, %cst_13 {dimension_numbers = #tpu.dot_dimension_numbers<[1], [0], [0], [1], [0, 0, 1, 1], [], []>} : vector<8x4xf32>, vector<4x16xf32>, vector<8x16xf32> -> vector<8x16xf32>
    %20 = arith.addf %17, %19 : vector<8x16xf32>
    %c0_14 = arith.constant 0 : index
    %c0_15 = arith.constant 0 : index
    %c0_16 = arith.constant 0 : index
    %21 = vector.load %arg4[%c0_14, %c0_15, %c0_16] : memref<1x8x16xf32, #tpu.memory_space<vmem>>, vector<1x8x16xf32>
    %22 = vector.shape_cast %21 : vector<1x8x16xf32> to vector<8x16xf32>
    %23 = vector.shape_cast %20 : vector<8x16xf32> to vector<1x8x16xf32>
    tpu.vector_store %arg4[%c0_14, %c0_15, %c0_16], %23 {strides = array<i32>} : memref<1x8x16xf32, #tpu.memory_space<vmem>>, vector<1x8x16xf32>,
    return
  }
  func.func @transform_0(%arg0: i32, %arg1: i32) -> (i32, i32, i32) {
    %c0_i32 = arith.constant 0 : i32
    %c0_i32_0 = arith.constant 0 : i32
    %c0_i32_1 = arith.constant 0 : i32
    return %arg0, %c0_i32, %c0_i32_0 : i32, i32, i32
  }
  func.func @transform_1(%arg0: i32, %arg1: i32) -> (i32, i32) {
    %c0_i32 = arith.constant 0 : i32
    %c0_i32_0 = arith.constant 0 : i32
    %c0_i32_1 = arith.constant 0 : i32
    return %c0_i32, %c0_i32_0 : i32, i32
  }
  func.func @transform_2(%arg0: i32, %arg1: i32) -> (i32, i32, i32) {
    %c0_i32 = arith.constant 0 : i32
    %c0_i32_0 = arith.constant 0 : i32
    return %arg0, %c0_i32, %arg1 : i32, i32, i32
  }
}

</mosaic_0001>

<llo_original>
// kernel: tpu_custom_call.1
$region0: #{tpu_custom_call.1}
  #allocation0 [shape = 'u32[]', space=smem, size = 0x4, offset = 0x4, fixed_abs, tag = 'smem constant byte address 0x4 - core index']
  #allocation1 [shape = 'u32[144,128]{1,0:T(1,128)}', space=vmem, size = 0x12000, scoped, tag = 'internal scratch']
  %s0 = inlined_call_operand.hbm [shape: f32[2,4,16], index: 0, kind: input, shape index: {}]
  %s1 = inlined_call_operand.hbm [shape: f32[8,12], index: 1, kind: input, shape index: {}]
  %s2 = inlined_call_operand.hbm [shape: f32[2,8,16], index: 2, kind: output, shape index: {}]
  %s3 = sld [smem:[#allocation0]]
  $region49: #{tpu_custom_call.1} parent=0
    _
  %s5 = ssub.s32 1, %s3
  %s6 = scalar_select 0, %s5, %s3
  $region1: #{tpu_custom_call.1} parent=0
    #allocation2 [shape = 'u8[4096]{0}', space=vmem, size = 0x1000, scoped, tag = 'input window, operand 0']
    #allocation3 [shape = 's32[2]{0}', space=sflag, size = 0x8, scoped, tag = 'scoped memory for tpu_custom_call.1']
    #allocation4 [shape = 's32[2]{0}', space=sflag, size = 0x8, scoped, tag = 'scoped memory for tpu_custom_call.1']
    #allocation5 [shape = 'u8[4096]{0}', space=vmem, size = 0x1000, scoped, tag = 'input window, operand 1, single buffered']
    #allocation6 [shape = 's32[1]{0}', space=sflag, size = 0x4, scoped, tag = 'scoped memory for tpu_custom_call.1']
    #allocation7 [shape = 'u8[8192]{0}', space=vmem, size = 0x2000, scoped, tag = 'output window, operand 0']
    %7 = vsyncpa [#allocation3], 0
    %s8 = scalar_lea.sflag [#allocation3], 1
    %9 = vsyncpa %s8, 0
    %10 = vsyncpa [#allocation6], 0
    %11 = vsyncpa [#allocation4], 0
    %s12 = scalar_lea.sflag [#allocation4], 1
    %13 = vsyncpa %s12, 0
    loop: start=0, step=1, limit=4
    $region2: #{tpu_custom_call.1} parent=1 // loop_pre_header
      _
    $region3: #{tpu_custom_call.1} parent=1 // loop_header
      %s15 = sphi 0, %s19
      %p16 = scmp.ge.s32.totalorder %s15, 4
      %s22 = sphi 0, %s34
      %s23 = sphi 0, %s30
      %s24 = sphi 0, %s22
      %s25 = sphi 0, %s23
      %s26 = sphi 0, %s24
      %s27 = sphi 0, %s25
      %s37 = sphi 0, %s39
      %s40 = sphi 0, %s37
      %s41 = sphi 0, %s40
      %s57 = sphi 0, %s41
      %s61 = sphi 0, %s61
      %s63 = sphi 0, %s61
      %s64 = sphi 0, %s63
      %s78 = sphi 0, %s64
      %s86 = sphi 0, %s88
      %s89 = sphi 0, %s86
      %s90 = sphi 0, %s89
      %s106 = sphi 0, %s90
    $region4: #{tpu_custom_call.1} parent=1 // loop_header_branch
      %18 = sbr.rel (%p16) target = $region8
    $region5: #{tpu_custom_call.1} parent=1 // loop_body
      %s20 = ssub.s32 %s15, 1
      %s21 = ssub.s32 %s15, 2
      %s28 = sadd.s32 1, %s23
      %p29 = scmp.ge.s32.totalorder %s28, 1
      %s30 = scalar_select %p29, 0, %s28
      %s31 = sadd.s32 1, %s22
      %s32 = scalar_select %p29, %s31, %s22
      %p33 = scmp.ge.s32.totalorder %s32, 2
      %s34 = scalar_select %p33, 0, %s32
      %s35 = ssub.s32 %s22, %s34
      %p36 = scmp.eq.s32.totalorder %s35, 0
      %s38 = sadd.s32 %s37, 1
      %s39 = scalar_select %p36, %s37, %s38
      %p42 = pneg %p36
      %p43 = scmp.eq.s32.totalorder %s15, 1
      %p44 = por %p42, %p43
      %p45 = scmp.ne.s32.totalorder %s37, %s40
      %p46 = scmp.eq.s32.totalorder %s15, 0
      %p47 = por %p45, %p46
      %p48 = scmp.ne.s32.totalorder %s37, %s40
      %p49 = scmp.eq.s32.totalorder %s20, 1
      %p50 = por %p48, %p49
      %p51 = scmp.ne.s32.totalorder %s40, %s41
      %p52 = scmp.eq.s32.totalorder %s20, 0
      %p53 = por %p51, %p52
      %p54 = scmp.ne.s32.totalorder %s40, %s41
      %p55 = scmp.eq.s32.totalorder %s21, 1
      %p56 = por %p54, %p55
      %p58 = scmp.ne.s32.totalorder %s41, %s57
      %p59 = scmp.eq.s32.totalorder %s21, 0
      %p60 = por %p58, %p59
      %s62 = sadd.s32 %s61, 1
      %p65 = scmp.eq.s32.totalorder %s15, 1
      %p66 = scmp.ne.s32.totalorder %s61, %s63
      %p67 = scmp.eq.s32.totalorder %s15, 0
      %p68 = por %p66, %p67
      %p69 = scmp.ne.s32.totalorder %s61, %s63
      %p70 = scmp.eq.s32.totalorder %s20, 1
      %p71 = por %p69, %p70
      %p72 = scmp.ne.s32.totalorder %s63, %s64
      %p73 = scmp.eq.s32.totalorder %s20, 0
      %p74 = por %p72, %p73
      %p75 = scmp.ne.s32.totalorder %s63, %s64
      %p76 = scmp.eq.s32.totalorder %s21, 1
      %p77 = por %p75, %p76
      %p79 = scmp.ne.s32.totalorder %s64, %s78
      %p80 = scmp.eq.s32.totalorder %s21, 0
      %p81 = por %p79, %p80
      %s82 = ssub.s32 %s22, %s34
      %s83 = ssub.s32 %s23, %s30
      %s84 = sor.u32 %s82, %s83
      %p85 = scmp.eq.s32.totalorder %s84, 0
      %s87 = sadd.s32 %s86, 1
      %s88 = scalar_select %p85, %s86, %s87
      %p91 = pneg %p85
      %p92 = scmp.eq.s32.totalorder %s15, 1
      %p93 = por %p91, %p92
      %p94 = scmp.ne.s32.totalorder %s86, %s89
      %p95 = scmp.eq.s32.totalorder %s15, 0
      %p96 = por %p94, %p95
      %p97 = scmp.ne.s32.totalorder %s86, %s89
      %p98 = scmp.eq.s32.totalorder %s20, 1
      %p99 = por %p97, %p98
      %p100 = scmp.ne.s32.totalorder %s89, %s90
      %p101 = scmp.eq.s32.totalorder %s20, 0
      %p102 = por %p100, %p101
      %p103 = scmp.ne.s32.totalorder %s89, %s90
      %p104 = scmp.eq.s32.totalorder %s21, 1
      %p105 = por %p103, %p104
      %p107 = scmp.ne.s32.totalorder %s90, %s106
      %p108 = scmp.eq.s32.totalorder %s21, 0
      %p109 = por %p107, %p108
      %p110 = scmp.le.s32.totalorder 1, %s15
      %p111 = scmp.lt.s32.totalorder %s15, 3
      %p112 = pnand %p110, %p111
      %p113 = pneg %p112
      // Predicated region
      $region9: #{tpu_custom_call.1} parent=5 // pred_check
        _
      $region10: #{tpu_custom_call.1} parent=5 // pred_check_branch
        %115 = sbr.rel (%p112) target = $region12
      $region11: #{tpu_custom_call.1} parent=5 // pred_region
        %s116 = ssub.s32 %s15, 1
        // Predicated region
        $region13: #{tpu_custom_call.1} parent=11 // pred_check
          %p117 = pneg %p74
        $region14: #{tpu_custom_call.1} parent=11 // pred_check_branch
          %119 = sbr.rel (%p117) target = $region16
        $region15: #{tpu_custom_call.1} parent=11 // pred_region
          %s121 = ssub.s32 128, 128
          %122 = vsyncadd [#allocation6], %s121
          %s124 = sshll.u32 [#allocation5], 4
          %s125 = int_to_ptr.vmem [resolvable:$true] %s124
          %127 = dma.hbm_to_vmem [thread:$0]  %s1, 128, %s125, [#allocation6]
        $region16: #{tpu_custom_call.1} parent=11 // pred_fallthru
          _
      $region12: #{tpu_custom_call.1} parent=5 // pred_fallthru
        _
      %p128 = scmp.lt.s32.totalorder %s15, 2
      // Predicated region
      $region17: #{tpu_custom_call.1} parent=5 // pred_check
        %p129 = pneg %p128
      $region18: #{tpu_custom_call.1} parent=5 // pred_check_branch
        %131 = sbr.rel (%p129) target = $region20
      $region19: #{tpu_custom_call.1} parent=5 // pred_region
        // Predicated region
        $region21: #{tpu_custom_call.1} parent=19 // pred_check
          %p132 = pneg %p47
        $region22: #{tpu_custom_call.1} parent=19 // pred_check_branch
          %134 = sbr.rel (%p132) target = $region24
        $region23: #{tpu_custom_call.1} parent=19 // pred_region
          %s135 = sand.u32 %s37, 1
          %s136 = scalar_lea.sflag [#allocation3], %s135
          %s137 = sand.u32 %s37, 1
          %s138 = smul.addr %s137, 4
          %s139 = scalar_lea.vmem [#allocation2], %s138
          %s141 = ssub.s32 64, 64
          %142 = vsyncadd %s136, %s141
          %s143 = smul.addr %s22, 64
          %s144 = scalar_lea.hbm %s0, %s143
          %s146 = sshll.u32 %s139, 4
          %s147 = int_to_ptr.vmem [resolvable:$true] %s146
          %149 = dma.hbm_to_vmem [thread:$0]  %s144, 64, %s147, %s136
        $region24: #{tpu_custom_call.1} parent=19 // pred_fallthru
          _
      $region20: #{tpu_custom_call.1} parent=5 // pred_fallthru
        _
      %p150 = scmp.le.s32.totalorder 1, %s15
      %p151 = scmp.lt.s32.totalorder %s15, 3
      %p152 = pnand %p150, %p151
      %p153 = pneg %p152
      // Predicated region
      $region25: #{tpu_custom_call.1} parent=5 // pred_check
        _
      $region26: #{tpu_custom_call.1} parent=5 // pred_check_branch
        %155 = sbr.rel (%p152) target = $region28
      $region27: #{tpu_custom_call.1} parent=5 // pred_region
        %s156 = ssub.s32 %s15, 1
        %s157 = sand.u32 %s40, 1
        %s158 = scalar_lea.sflag [#allocation3], %s157
        %s159 = sand.u32 %s40, 1
        %s160 = smul.addr %s159, 4
        %s161 = scalar_lea.vmem [#allocation2], %s160
        // Predicated region
        $region29: #{tpu_custom_call.1} parent=27 // pred_check
          %p162 = pneg %p53
        $region30: #{tpu_custom_call.1} parent=27 // pred_check_branch
          %164 = sbr.rel (%p162) target = $region32
        $region31: #{tpu_custom_call.1} parent=27 // pred_region
          %165 = dma.done %s158, 64
        $region32: #{tpu_custom_call.1} parent=27 // pred_fallthru
          _
        // Predicated region
        $region33: #{tpu_custom_call.1} parent=27 // pred_check
          %p166 = pneg %p74
        $region34: #{tpu_custom_call.1} parent=27 // pred_check_branch
          %168 = sbr.rel (%p166) target = $region36
        $region35: #{tpu_custom_call.1} parent=27 // pred_region
          %169 = dma.done [#allocation6], 128
        $region36: #{tpu_custom_call.1} parent=27 // pred_fallthru
          _
        %s170 = sand.u32 %s40, 1
        %s171 = scalar_lea.sflag [#allocation3], %s170
        %s172 = sand.u32 %s40, 1
        %s173 = smul.addr %s172, 4
        %s174 = scalar_lea.vmem [#allocation2], %s173
        %p175 = pneg %p53
        %p176 = pneg %p50
        %p177 = pneg %p74
        %p178 = pneg %p71
        %p179 = pneg %p102
        %p180 = pneg %p99
        %s181 = sand.u32 %s89, 1
        %s182 = scalar_lea.sflag [#allocation4], %s181
        %s183 = sand.u32 %s89, 1
        %s184 = smul.addr %s183, 8
        %s185 = scalar_lea.vmem [#allocation7], %s184
        %v186 = vld [vmem:[#allocation5] sm:$0xff]
        %v187 = vld [vmem:[%s161] sm:$0xf]
        %189 = vrot.lane.b32.xlu0 %v187, 1
        %v190 = vpop.permute.xlu0 %189
        %vm192 = vcmask 7168
        %v193 = vsel %vm192, 0.0, %v190
        %194 = vrot.lane.b32.xlu0 %v187, 127
        %v195 = vpop.permute.xlu0 %194
        %vm197 = vcmask 121856
        %v198 = vsel %vm197, %v195, 0.0
        %200 = vrot.lane.b32.xlu0 %v186, 124
        %v201 = vpop.permute.xlu0 %200
        %vm202 = vcmask 31744
        %v203 = vsel %vm202, %v201, 0
        %vm205 = vcmask 1043456
        %v206 = vsel %vm205, %v187, 0
        %208 = vmatprep.subr.mxu0 0.0
        %209 = vmatpush1.msra.mxu0 0.0
        %210 = vmatprep.subr.mxu0 0.0
        %211 = vmatpush1.msra.mxu0 0.0
        %212 = vmatprep.subr.mxu0 0.0
        %213 = vmatpush1.msra.mxu0 0.0
        %214 = vmatprep.subr.mxu0 0.0
        %215 = vmatpush1.msra.mxu0 0.0
        %216 = vmatprep.subr.mxu0 0.0
        %217 = vmatpush1.msra.mxu0 0.0
        %218 = vmatprep.subr.mxu0 0.0
        %219 = vmatpush1.msra.mxu0 0.0
        %220 = vmatprep.subr.mxu0 0.0
        %221 = vmatpush1.msra.mxu0 0.0
        %222 = vmatprep.subr.mxu0 0.0
        %223 = vmatpush1.msra.mxu0 0.0
        %224 = vmatprep.subr.mxu0 0.0
        %225 = vmatpush1.msra.mxu0 0.0
        %226 = vmatprep.subr.mxu0 0.0
        %227 = vmatpush1.msra.mxu0 0.0
        %228 = vmatprep.subr.mxu0 0.0
        %229 = vmatpush1.msra.mxu0 0.0
        %230 = vmatprep.subr.mxu0 0.0
        %231 = vmatpush1.msra.mxu0 0.0
        %232 = vmatprep.subr.mxu0 0.0
        %233 = vmatpush1.msra.mxu0 0.0
        %234 = vmatprep.subr.mxu0 0.0
        %235 = vmatpush1.msra.mxu0 0.0
        %236 = vmatprep.subr.mxu0 0.0
        %237 = vmatpush1.msra.mxu0 0.0
        %238 = vmatprep.subr.mxu0 0.0
        %239 = vmatpush1.msra.mxu0 %v206
        %240 = vmatprep.subr.mxu0 0.0
        %241 = vmatpush2.msra.mxu0 0.0
        %242 = vmatprep.subr.mxu0 0.0
        %243 = vmatpush2.msra.mxu0 0.0
        %244 = vmatprep.subr.mxu0 0.0
        %245 = vmatpush2.msra.mxu0 0.0
        %246 = vmatprep.subr.mxu0 0.0
        %247 = vmatpush2.msra.mxu0 0.0
        %248 = vmatprep.subr.mxu0 0.0
        %249 = vmatpush2.msra.mxu0 0.0
        %250 = vmatprep.subr.mxu0 0.0
        %251 = vmatpush2.msra.mxu0 0.0
        %252 = vmatprep.subr.mxu0 0.0
        %253 = vmatpush2.msra.mxu0 0.0
        %254 = vmatprep.subr.mxu0 0.0
        %255 = vmatpush2.msra.mxu0 0.0
        %256 = vmatprep.subr.mxu0 0.0
        %257 = vmatpush2.msra.mxu0 0.0
        %258 = vmatprep.subr.mxu0 0.0
        %259 = vmatpush2.msra.mxu0 0.0
        %260 = vmatprep.subr.mxu0 0.0
        %261 = vmatpush2.msra.mxu0 0.0
        %262 = vmatprep.subr.mxu0 0.0
        %263 = vmatpush2.msra.mxu0 0.0
        %264 = vmatprep.subr.mxu0 0.0
        %265 = vmatpush2.msra.mxu0 0.0
        %266 = vmatprep.subr.mxu0 0.0
        %267 = vmatpush2.msra.mxu0 0.0
        %268 = vmatprep.subr.mxu0 0.0
        %269 = vmatpush2.msra.mxu0 0.0
        %270 = vmatprep.subr.mxu0 0.0
        %271 = vmatpush2.msra.mxu0 0.0
        %272 = vmatprep.mubr.f32.mxu0 0.0
        %273 = vmatmul.mubr.f32.gmra.mxu0 %v203
        %v274 = vpop.f32.mrf.mxu0
        %v275 = vadd.f32 0.0, %v274
        %v276 = vpop.f32.mrf.mxu0
        %277 = vdwg.mxu0
        %v278 = vsel %vm202, %v186, 0
        %v281 = vsel %vm205, %v193, 0
        %283 = vmatprep.subr.mxu0 0.0
        %284 = vmatpush1.msra.mxu0 0.0
        %285 = vmatprep.subr.mxu0 0.0
        %286 = vmatpush1.msra.mxu0 0.0
        %287 = vmatprep.subr.mxu0 0.0
        %288 = vmatpush1.msra.mxu0 0.0
        %289 = vmatprep.subr.mxu0 0.0
        %290 = vmatpush1.msra.mxu0 0.0
        %291 = vmatprep.subr.mxu0 0.0
        %292 = vmatpush1.msra.mxu0 0.0
        %293 = vmatprep.subr.mxu0 0.0
        %294 = vmatpush1.msra.mxu0 0.0
        %295 = vmatprep.subr.mxu0 0.0
        %296 = vmatpush1.msra.mxu0 0.0
        %297 = vmatprep.subr.mxu0 0.0
        %298 = vmatpush1.msra.mxu0 0.0
        %299 = vmatprep.subr.mxu0 0.0
        %300 = vmatpush1.msra.mxu0 0.0
        %301 = vmatprep.subr.mxu0 0.0
        %302 = vmatpush1.msra.mxu0 0.0
        %303 = vmatprep.subr.mxu0 0.0
        %304 = vmatpush1.msra.mxu0 0.0
        %305 = vmatprep.subr.mxu0 0.0
        %306 = vmatpush1.msra.mxu0 0.0
        %307 = vmatprep.subr.mxu0 0.0
        %308 = vmatpush1.msra.mxu0 0.0
        %309 = vmatprep.subr.mxu0 0.0
        %310 = vmatpush1.msra.mxu0 0.0
        %311 = vmatprep.subr.mxu0 0.0
        %312 = vmatpush1.msra.mxu0 0.0
        %313 = vmatprep.subr.mxu0 0.0
        %314 = vmatpush1.msra.mxu0 %v281
        %315 = vmatprep.subr.mxu0 0.0
        %316 = vmatpush2.msra.mxu0 0.0
        %317 = vmatprep.subr.mxu0 0.0
        %318 = vmatpush2.msra.mxu0 0.0
        %319 = vmatprep.subr.mxu0 0.0
        %320 = vmatpush2.msra.mxu0 0.0
        %321 = vmatprep.subr.mxu0 0.0
        %322 = vmatpush2.msra.mxu0 0.0
        %323 = vmatprep.subr.mxu0 0.0
        %324 = vmatpush2.msra.mxu0 0.0
        %325 = vmatprep.subr.mxu0 0.0
        %326 = vmatpush2.msra.mxu0 0.0
        %327 = vmatprep.subr.mxu0 0.0
        %328 = vmatpush2.msra.mxu0 0.0
        %329 = vmatprep.subr.mxu0 0.0
        %330 = vmatpush2.msra.mxu0 0.0
        %331 = vmatprep.subr.mxu0 0.0
        %332 = vmatpush2.msra.mxu0 0.0
        %333 = vmatprep.subr.mxu0 0.0
        %334 = vmatpush2.msra.mxu0 0.0
        %335 = vmatprep.subr.mxu0 0.0
        %336 = vmatpush2.msra.mxu0 0.0
        %337 = vmatprep.subr.mxu0 0.0
        %338 = vmatpush2.msra.mxu0 0.0
        %339 = vmatprep.subr.mxu0 0.0
        %340 = vmatpush2.msra.mxu0 0.0
        %341 = vmatprep.subr.mxu0 0.0
        %342 = vmatpush2.msra.mxu0 0.0
        %343 = vmatprep.subr.mxu0 0.0
        %344 = vmatpush2.msra.mxu0 0.0
        %345 = vmatprep.subr.mxu0 0.0
        %346 = vmatpush2.msra.mxu0 0.0
        %347 = vmatprep.mubr.f32.mxu0 0.0
        %348 = vmatmul.mubr.f32.gmra.mxu0 %v278
        %v349 = vpop.f32.mrf.mxu0
        %v350 = vadd.f32 %v275, %v349
        %v351 = vpop.f32.mrf.mxu0
        %352 = vdwg.mxu0
        %353 = vrot.lane.b32.xlu0 %v186, 120
        %v354 = vpop.permute.xlu0 %353
        %v355 = vsel %vm202, %v354, 0
        %v358 = vsel %vm205, %v198, 0
        %360 = vmatprep.subr.mxu0 0.0
        %361 = vmatpush1.msra.mxu0 0.0
        %362 = vmatprep.subr.mxu0 0.0
        %363 = vmatpush1.msra.mxu0 0.0
        %364 = vmatprep.subr.mxu0 0.0
        %365 = vmatpush1.msra.mxu0 0.0
        %366 = vmatprep.subr.mxu0 0.0
        %367 = vmatpush1.msra.mxu0 0.0
        %368 = vmatprep.subr.mxu0 0.0
        %369 = vmatpush1.msra.mxu0 0.0
        %370 = vmatprep.subr.mxu0 0.0
        %371 = vmatpush1.msra.mxu0 0.0
        %372 = vmatprep.subr.mxu0 0.0
        %373 = vmatpush1.msra.mxu0 0.0
        %374 = vmatprep.subr.mxu0 0.0
        %375 = vmatpush1.msra.mxu0 0.0
        %376 = vmatprep.subr.mxu0 0.0
        %377 = vmatpush1.msra.mxu0 0.0
        %378 = vmatprep.subr.mxu0 0.0
        %379 = vmatpush1.msra.mxu0 0.0
        %380 = vmatprep.subr.mxu0 0.0
        %381 = vmatpush1.msra.mxu0 0.0
        %382 = vmatprep.subr.mxu0 0.0
        %383 = vmatpush1.msra.mxu0 0.0
        %384 = vmatprep.subr.mxu0 0.0
        %385 = vmatpush1.msra.mxu0 0.0
        %386 = vmatprep.subr.mxu0 0.0
        %387 = vmatpush1.msra.mxu0 0.0
        %388 = vmatprep.subr.mxu0 0.0
        %389 = vmatpush1.msra.mxu0 0.0
        %390 = vmatprep.subr.mxu0 0.0
        %391 = vmatpush1.msra.mxu0 %v358
        %392 = vmatprep.subr.mxu0 0.0
        %393 = vmatpush2.msra.mxu0 0.0
        %394 = vmatprep.subr.mxu0 0.0
        %395 = vmatpush2.msra.mxu0 0.0
        %396 = vmatprep.subr.mxu0 0.0
        %397 = vmatpush2.msra.mxu0 0.0
        %398 = vmatprep.subr.mxu0 0.0
        %399 = vmatpush2.msra.mxu0 0.0
        %400 = vmatprep.subr.mxu0 0.0
        %401 = vmatpush2.msra.mxu0 0.0
        %402 = vmatprep.subr.mxu0 0.0
        %403 = vmatpush2.msra.mxu0 0.0
        %404 = vmatprep.subr.mxu0 0.0
        %405 = vmatpush2.msra.mxu0 0.0
        %406 = vmatprep.subr.mxu0 0.0
        %407 = vmatpush2.msra.mxu0 0.0
        %408 = vmatprep.subr.mxu0 0.0
        %409 = vmatpush2.msra.mxu0 0.0
        %410 = vmatprep.subr.mxu0 0.0
        %411 = vmatpush2.msra.mxu0 0.0
        %412 = vmatprep.subr.mxu0 0.0
        %413 = vmatpush2.msra.mxu0 0.0
        %414 = vmatprep.subr.mxu0 0.0
        %415 = vmatpush2.msra.mxu0 0.0
        %416 = vmatprep.subr.mxu0 0.0
        %417 = vmatpush2.msra.mxu0 0.0
        %418 = vmatprep.subr.mxu0 0.0
        %419 = vmatpush2.msra.mxu0 0.0
        %420 = vmatprep.subr.mxu0 0.0
        %421 = vmatpush2.msra.mxu0 0.0
        %422 = vmatprep.subr.mxu0 0.0
        %423 = vmatpush2.msra.mxu0 0.0
        %424 = vmatprep.mubr.f32.mxu0 0.0
        %425 = vmatmul.mubr.f32.gmra.mxu0 %v355
        %v426 = vpop.f32.mrf.mxu0
        %v427 = vadd.f32 0.0, %v426
        %v428 = vpop.f32.mrf.mxu0
        %429 = vdwg.mxu0
        %v430 = vadd.f32 %v350, %v427
        %vm431 = vcmask 130048
        %432 = vst.msk [vmem:[%s185] sm:$0xff] %vm431, %v430
        %s433 = sand.u32 %s89, 1
        %s434 = scalar_lea.sflag [#allocation4], %s433
        %s435 = sand.u32 %s89, 1
        %s436 = smul.addr %s435, 8
        %s437 = scalar_lea.vmem [#allocation7], %s436
        // Predicated region
        $region37: #{tpu_custom_call.1} parent=27 // pred_check
          %p438 = pneg %p99
        $region38: #{tpu_custom_call.1} parent=27 // pred_check_branch
          %440 = sbr.rel (%p438) target = $region40
        $region39: #{tpu_custom_call.1} parent=27 // pred_region
          %s442 = ssub.s32 128, 128
          %443 = vsyncadd %s434, %s442
          %s444 = sadd.s32 %s25, %s24
          %s445 = smul.addr %s444, 128
          %s446 = scalar_lea.hbm %s2, %s445
          %s448 = sshll.u32 %s437, 4
          %s449 = int_to_ptr.vmem [resolvable:$true] %s448
          %451 = dma.vmem_to_hbm [thread:$0]  %s449, 128, %s446, %s434
        $region40: #{tpu_custom_call.1} parent=27 // pred_fallthru
          _
      $region28: #{tpu_custom_call.1} parent=5 // pred_fallthru
        _
      %p452 = scmp.le.s32.totalorder 2, %s15
      // Predicated region
      $region41: #{tpu_custom_call.1} parent=5 // pred_check
        %p453 = pneg %p452
      $region42: #{tpu_custom_call.1} parent=5 // pred_check_branch
        %455 = sbr.rel (%p453) target = $region44
      $region43: #{tpu_custom_call.1} parent=5 // pred_region
        %s456 = ssub.s32 %s15, 2
        // Predicated region
        $region45: #{tpu_custom_call.1} parent=43 // pred_check
          %p457 = pneg %p105
        $region46: #{tpu_custom_call.1} parent=43 // pred_check_branch
          %459 = sbr.rel (%p457) target = $region48
        $region47: #{tpu_custom_call.1} parent=43 // pred_region
          %s460 = sand.u32 %s90, 1
          %s461 = scalar_lea.sflag [#allocation4], %s460
          %s462 = sand.u32 %s90, 1
          %s463 = smul.addr %s462, 8
          %s464 = scalar_lea.vmem [#allocation7], %s463
          %465 = dma.done %s461, 128
        $region48: #{tpu_custom_call.1} parent=43 // pred_fallthru
          _
      $region44: #{tpu_custom_call.1} parent=5 // pred_fallthru
        _
    $region6: #{tpu_custom_call.1} parent=1 // loop_footer
      %s19 = sadd.s32 1, %s15
    $region7: #{tpu_custom_call.1} parent=1 // loop_footer_branch
      %14 = sbr.rel target = $region3
    $region8: #{tpu_custom_call.1} parent=1 // loop_exit
      _
    %466 = vsyncpa [#allocation3], 1
    %s467 = scalar_lea.sflag [#allocation3], 1
    %468 = vsyncpa %s467, 1
    %469 = vsyncpa [#allocation6], 1
    %470 = vsyncpa [#allocation4], 1
    %s471 = scalar_lea.sflag [#allocation4], 1
    %472 = vsyncpa %s471, 1

</llo_original>
